<compile_context>
chip_gen: v6e
topology: v6e:2x2x1
jax: 0.10.0
libtpu: 0.0.40
codegen_flags: <defaults>
</compile_context>

<pallas_src>
import math
from functools import partial

import numpy as np

import jax
import jax.numpy as jnp
from jax.experimental import pallas as pl
from jax.experimental.pallas import tpu as pltpu

# ----------------------------------------------------------------------------
# delta2bbox constants (mmdet RPN defaults)
# ----------------------------------------------------------------------------
_MEANS = (0.0, 0.0, 0.0, 0.0)
_STDS = (1.0, 1.0, 1.0, 1.0)
_MAX_RATIO = float(abs(math.log(16.0 / 1000.0)))   # wh_ratio_clip = 16/1000
_MAX_LANE_TILE = 8192                              # 32 rows * 8192 * 4B = 1 MiB/block


def _plan_layout(ntot):
    """Return (w_lanes, lane_tile): padded lane count (mult of tile) and tile."""
    w = -(-ntot // 8)                 # anchors per sublane row (ceil)
    w = -(-w // 128) * 128            # lane-align
    if w > _MAX_LANE_TILE:
        tile = _MAX_LANE_TILE
        w = -(-w // tile) * tile
    elif w >= 512:
        # enough work to split -> >=2 grid steps so "parallel" uses both
        # TensorCores on v7x (no-op on single-TC v5e/v6e).
        tile = -(-(w // 2) // 128) * 128
        w = 2 * tile
    else:
        tile = w
    return w, tile


# ----------------------------------------------------------------------------
# Pallas kernel: delta2bbox decode + clip to image.
#   anchor slab (32, T): rows 0-7 x1, 8-15 y1, 16-23 x2, 24-31 y2
#   delta  slab (32, T): rows 0-7 dx, 8-15 dy, 16-23 dw, 24-31 dh
#   output slab (32, T): rows 0-7 X1, 8-15 Y1, 16-23 X2, 24-31 Y2
# ----------------------------------------------------------------------------
def _make_rpn_decode_kernel(img_h, img_w):
    # img_shape comes from python img_meta -> bake clip bounds as constants.
    xmax = float(img_w - 1)
    ymax = float(img_h - 1)

    def kernel(a_ref, d_ref, o_ref):
        ax1 = a_ref[0:8, :]
        ay1 = a_ref[8:16, :]
        ax2 = a_ref[16:24, :]
        ay2 = a_ref[24:32, :]
        dx = d_ref[0:8, :] * _STDS[0] + _MEANS[0]
        dy = d_ref[8:16, :] * _STDS[1] + _MEANS[1]
        dw = jnp.clip(d_ref[16:24, :] * _STDS[2] + _MEANS[2],
                      -_MAX_RATIO, _MAX_RATIO)
        dh = jnp.clip(d_ref[24:32, :] * _STDS[3] + _MEANS[3],
                      -_MAX_RATIO, _MAX_RATIO)

        px = (ax1 + ax2) * 0.5
        py = (ay1 + ay2) * 0.5
        pw = ax2 - ax1 + 1.0
        ph = ay2 - ay1 + 1.0

        gw = pw * jnp.exp(dw)          # exp runs on the EUP slot
        gh = ph * jnp.exp(dh)
        gx = px + pw * dx
        gy = py + ph * dy

        # Full 8-sublane, full-lane-width stores (unmasked vst).
        o_ref[0:8, :] = jnp.clip(gx - gw * 0.5 + 0.5, 0.0, xmax)
        o_ref[8:16, :] = jnp.clip(gy - gh * 0.5 + 0.5, 0.0, ymax)
        o_ref[16:24, :] = jnp.clip(gx + gw * 0.5 - 0.5, 0.0, xmax)
        o_ref[24:32, :] = jnp.clip(gy + gh * 0.5 - 0.5, 0.0, ymax)

    return kernel


def rpn_decode(anchor_slab, delta_slab, img_h, img_w, lane_tile):
    """anchor_slab, delta_slab: (32, W) f32 with W % lane_tile == 0."""
    rows, w = anchor_slab.shape
    assert rows == 32 and w % lane_tile == 0
    grid = (w // lane_tile,)
    return pl.pallas_call(
        _make_rpn_decode_kernel(img_h, img_w),
        out_shape=jax.ShapeDtypeStruct((32, w), jnp.float32),
        grid=grid,
        in_specs=[pl.BlockSpec((32, lane_tile), lambda i: (0, i)),
                  pl.BlockSpec((32, lane_tile), lambda i: (0, i))],
        out_specs=pl.BlockSpec((32, lane_tile), lambda i: (0, i)),
        compiler_params=pltpu.CompilerParams(
            # independent tiles (no accumulator) -> shard across TCs on v7x
            dimension_semantics=("parallel",)),
    )(anchor_slab, delta_slab)


# ----------------------------------------------------------------------------
# AnchorGenerator (deterministic operator "parameters", plain numpy setup)
# ----------------------------------------------------------------------------
def gen_base_anchors(base_size, scales, ratios):
    w = h = float(base_size)
    x_ctr = 0.5 * (w - 1.0)
    y_ctr = 0.5 * (h - 1.0)
    ratios = np.asarray(ratios, np.float32)
    scales = np.asarray(scales, np.float32)
    h_ratios = np.sqrt(ratios)
    w_ratios = 1.0 / h_ratios
    ws = (w * w_ratios[:, None] * scales[None, :]).reshape(-1)
    hs = (h * h_ratios[:, None] * scales[None, :]).reshape(-1)
    base = np.stack([x_ctr - 0.5 * (ws - 1.0), y_ctr - 0.5 * (hs - 1.0),
                     x_ctr + 0.5 * (ws - 1.0), y_ctr + 0.5 * (hs - 1.0)],
                    axis=-1)
    return base.astype(np.float32)                      # (A, 4)


def grid_anchors(base_anchors, feat_h, feat_w, stride):
    shift_x = np.arange(feat_w, dtype=np.float32) * stride
    shift_y = np.arange(feat_h, dtype=np.float32) * stride
    sxx = np.tile(shift_x, feat_h)                      # x varies fastest
    syy = np.repeat(shift_y, feat_w)
    shifts = np.stack([sxx, syy, sxx, syy], axis=-1)    # (H*W, 4)
    allb = (base_anchors[None, :, :] + shifts[:, None, :]).reshape(-1, 4)
    return allb.astype(np.float32)                      # (H*W*A, 4)


def _pack_anchor_slab(anchors_nd, npad):
    """(Ntot, 4) numpy -> (32, npad//8) numpy, field j at rows 8j..8j+7."""
    ntot = anchors_nd.shape[0]
    w = npad // 8
    slab = np.zeros((32, w), np.float32)
    for j in range(4):
        col = np.zeros((npad,), np.float32)
        col[:ntot] = anchors_nd[:, j]
        slab[8 * j:8 * j + 8, :] = col.reshape(8, w)
    return slab


# ----------------------------------------------------------------------------
# get_bboxes glue (top-k, NMS) -- plain JAX under jit, fixed shapes
# ----------------------------------------------------------------------------
def _nms_sorted(dets, iou_thr):
    """dets sorted by descending score; suppressed rows keep position, score=-1."""
    boxes = dets[:, :4]
    scores = dets[:, 4]
    n = boxes.shape[0]
    x1, y1, x2, y2 = boxes[:, 0], boxes[:, 1], boxes[:, 2], boxes[:, 3]
    areas = (x2 - x1 + 1.0) * (y2 - y1 + 1.0)

    # Vectorized (n x n) IoU matrix computed once; only the greedy suppression
    # sweep is sequential (unrolled for small static n).
    xx1 = jnp.maximum(x1[:, None], x1[None, :])
    yy1 = jnp.maximum(y1[:, None], y1[None, :])
    xx2 = jnp.minimum(x2[:, None], x2[None, :])
    yy2 = jnp.minimum(y2[:, None], y2[None, :])
    w = jnp.maximum(0.0, xx2 - xx1 + 1.0)
    h = jnp.maximum(0.0, yy2 - yy1 + 1.0)
    inter = w * h
    iou = inter / (areas[:, None] + areas[None, :] - inter)
    idx = jnp.arange(n)

    keep = jnp.ones((n,), jnp.bool_)
    if n <= 256:
        for i in range(n):                               # static unroll
            suppress = (iou[i] > iou_thr) & (idx > i) & keep[i]
            keep = keep & (~suppress)
    else:
        def body(i, k):
            suppress = (iou[i] > iou_thr) & (idx > i) & k[i]
            return k & (~suppress)
        keep = jax.lax.fori_loop(0, n, body, keep)

    kept_scores = jnp.where(keep, scores, -1.0)
    order = jnp.argsort(-kept_scores)
    out = jnp.concatenate([boxes, kept_scores[:, None]], axis=-1)[order]
    # TODO(synk): torch NMS returns a variable number of dets; here suppressed
    # rows are padded with score=-1 to keep shapes static.
    return out


@partial(jax.jit, static_argnames=("img_h", "img_w", "ntot", "lane_tile",
                                   "nms_pre", "nms_post", "max_num", "nms_thr"))
def _get_bboxes_single(cls_scores, bbox_preds, anchor_slab, *, img_h, img_w,
                       ntot, lane_tile, nms_pre, nms_post, max_num, nms_thr):
    num_levels = len(cls_scores)
    w_lanes = anchor_slab.shape[1]
    npad = 8 * w_lanes

    level_logits, level_deltas, level_sizes = [], [], []
    for lvl in range(num_levels):
        score_map = cls_scores[lvl].astype(jnp.float32)   # (A, H, W) (sigmoid cls)
        bbox_map = bbox_preds[lvl].astype(jnp.float32)    # (A*4, H, W)
        a4, fh, fw = bbox_map.shape
        A = a4 // 4
        # Single fused transpose directly into field-major layout:
        # (A,4,H,W) -> (4,H,W,A) -> (4, H*W*A), anchor order = (h, w, a)
        # exactly as mmdet's permute(1,2,0).reshape(-1,4).
        deltas = jnp.transpose(bbox_map.reshape(A, 4, fh, fw),
                               (1, 2, 3, 0)).reshape(4, -1)
        logits = jnp.transpose(score_map, (1, 2, 0)).reshape(-1)
        level_deltas.append(deltas)
        level_logits.append(logits)
        level_sizes.append(int(fh * fw * A))

    # Field-major delta slab in the kernel's dense (8-sublane) layout.
    deltas_all = jnp.concatenate(level_deltas, axis=1)            # (4, Ntot)
    deltas_pad = jnp.pad(deltas_all, ((0, 0), (0, npad - ntot)))  # (4, Npad)
    delta_slab = deltas_pad.reshape(4, 8, w_lanes).reshape(32, w_lanes)

    box_slab = rpn_decode(anchor_slab, delta_slab, img_h, img_w, lane_tile)
    boxes_all = box_slab.reshape(4, 8, w_lanes).reshape(4, npad)[:, :ntot]

    mlvl_props = []
    off = 0
    for lvl in range(num_levels):
        n = level_sizes[lvl]
        logits = level_logits[lvl]
        k = min(int(nms_pre), n)
        # sigmoid is monotonic -> select on raw logits; apply EXACT sigmoid
        # only to the <=nms_pre selected candidates.
        top_logits, top_idx = jax.lax.top_k(logits, k)
        scores = jax.nn.sigmoid(top_logits)
        props = boxes_all[:, off + top_idx].T                     # (k, 4)
        off += n
        # min_bbox_size == 0 in cfg -> no small-box filtering needed.
        dets = jnp.concatenate([props, scores[:, None]], axis=-1)
        dets = _nms_sorted(dets, nms_thr)
        mlvl_props.append(dets[:nms_post])

    all_dets = jnp.concatenate(mlvl_props, axis=0)
    num = min(int(max_num), int(all_dets.shape[0]))
    _, idx = jax.lax.top_k(all_dets[:, 4], num)
    return all_dets[idx]                                          # (num, 5)


def get_bboxes(cls_scores, bbox_preds, img_metas, anchor_slab, ntot,
               lane_tile, desc):
    results = []
    for img_id, meta in enumerate(img_metas):
        per_cls = tuple(s[img_id] for s in cls_scores)
        per_bbox = tuple(b[img_id] for b in bbox_preds)
        h, w = meta['img_shape'][:2]
        results.append(_get_bboxes_single(
            per_cls, per_bbox, anchor_slab,
            img_h=int(h), img_w=int(w), ntot=int(ntot),
            lane_tile=int(lane_tile),
            nms_pre=int(desc['nms_pre']), nms_post=int(desc['nms_post']),
            max_num=int(desc['max_num']), nms_thr=float(desc['nms_thr'])))
    return results


# ----------------------------------------------------------------------------
# Proposals operator (mirrors the PyTorch module; it holds no learned weights,
# only deterministic anchor-generator parameters)
# ----------------------------------------------------------------------------
class Proposals:
    def __init__(self, desc):
        self.desc = desc
        self.base_anchors = []
        for anchor_base in list(desc['anchor_strides']):
            self.base_anchors.append(
                gen_base_anchors(anchor_base, desc['anchor_scales'],
                                 desc['anchor_ratios']))
        self._anchor_cache = {}   # featmap sizes -> packed anchor slab

    def _packed_anchors(self, featmap_sizes):
        key = tuple(featmap_sizes)
        if key not in self._anchor_cache:
            mlvl = [grid_anchors(self.base_anchors[i], fh, fw,
                                 self.desc['anchor_strides'][i])
                    for i, (fh, fw) in enumerate(featmap_sizes)]
            anchors_all = np.concatenate(mlvl, axis=0)        # (Ntot, 4)
            ntot = int(anchors_all.shape[0])
            w_lanes, tile = _plan_layout(ntot)
            slab = _pack_anchor_slab(anchors_all, 8 * w_lanes)
            self._anchor_cache[key] = (jnp.asarray(slab), ntot, tile)
        return self._anchor_cache[key]

    def __call__(self, x):
        cls_scores = x[2][0]
        bbox_preds = x[2][1]
        img_metas = [x[0]['img_meta']]
        featmap_sizes = [tuple(int(s) for s in f.shape[-2:]) for f in cls_scores]
        anchor_slab, ntot, lane_tile = self._packed_anchors(featmap_sizes)
        return (get_bboxes(cls_scores, bbox_preds, img_metas, anchor_slab,
                           ntot, lane_tile, self.desc), x[0])


# ----------------------------------------------------------------------------
# main
# ----------------------------------------------------------------------------
if __name__ == "__main__":
    desc = dict(anchor_strides=(4, 8),
                anchor_scales=(8,),
                anchor_ratios=(0.5, 1.0, 2.0),
                nms_pre=64, nms_post=32, max_num=48,
                nms_thr=0.7, min_bbox_size=0)
    A = len(desc['anchor_scales']) * len(desc['anchor_ratios'])   # 3 anchors/loc

    key = jax.random.PRNGKey(0)
    k1, k2, k3, k4 = jax.random.split(key, 4)
    # RPN head outputs: two pyramid levels, batch = 1, NCHW.
    cls_scores = [jax.random.normal(k1, (1, A, 16, 16), jnp.float32),
                  jax.random.normal(k2, (1, A, 8, 8), jnp.float32)]
    bbox_preds = [0.1 * jax.random.normal(k3, (1, A * 4, 16, 16), jnp.float32),
                  0.1 * jax.random.normal(k4, (1, A * 4, 8, 8), jnp.float32)]

    x = ({'img_meta': {'img_shape': (64, 64, 3), 'scale_factor': 1.0}},
         None,
         (cls_scores, bbox_preds))

    model = Proposals(desc)
    (proposal_list, meta_out) = model(x)
    proposals = jax.block_until_ready(proposal_list[0])

    assert proposals.shape == (desc['max_num'], 5)
    assert bool(jnp.all(jnp.isfinite(proposals)))
    print("KERNEL_OK")
</pallas_src>

<mosaic_0001>
module attributes {stable_mosaic.version = 11 : i64} {
  func.func @kernel(%arg0: i32, %arg1: memref<32x128xf32, #tpu.memory_space<vmem>>, %arg2: memref<32x128xf32, #tpu.memory_space<vmem>>, %arg3: memref<32x128xf32, #tpu.memory_space<vmem>>) attributes {dimension_semantics = [#tpu.dimension_semantics<parallel>], iteration_bounds = array<i64: 1>, scalar_prefetch = 0 : i64, scratch_operands = 0 : i64, tpu.core_type = #tpu.core_type<tc>, window_params = [{transform_indices = @transform_0, window_bounds = array<i64: 32, 128>}, {transform_indices = @transform_1, window_bounds = array<i64: 32, 128>}, {transform_indices = @transform_2, window_bounds = array<i64: 32, 128>}]} {
    %c0 = arith.constant 0 : index
    %c0_0 = arith.constant 0 : index
    %0 = vector.load %arg1[%c0, %c0_0] : memref<32x128xf32, #tpu.memory_space<vmem>>, vector<8x128xf32>
    %c8 = arith.constant 8 : index
    %c0_1 = arith.constant 0 : index
    %1 = vector.load %arg1[%c8, %c0_1] : memref<32x128xf32, #tpu.memory_space<vmem>>, vector<8x128xf32>
    %c16 = arith.constant 16 : index
    %c0_2 = arith.constant 0 : index
    %2 = vector.load %arg1[%c16, %c0_2] : memref<32x128xf32, #tpu.memory_space<vmem>>, vector<8x128xf32>
    %c24 = arith.constant 24 : index
    %c0_3 = arith.constant 0 : index
    %3 = vector.load %arg1[%c24, %c0_3] : memref<32x128xf32, #tpu.memory_space<vmem>>, vector<8x128xf32>
    %c0_4 = arith.constant 0 : index
    %c0_5 = arith.constant 0 : index
    %4 = vector.load %arg2[%c0_4, %c0_5] : memref<32x128xf32, #tpu.memory_space<vmem>>, vector<8x128xf32>
    %cst = arith.constant 1.000000e+00 : f32
    %5 = vector.broadcast %cst : f32 to vector<8x128xf32>
    %6 = arith.mulf %4, %5 : vector<8x128xf32>
    %cst_6 = arith.constant 0.000000e+00 : f32
    %7 = vector.broadcast %cst_6 : f32 to vector<8x128xf32>
    %8 = arith.addf %6, %7 : vector<8x128xf32>
    %c8_7 = arith.constant 8 : index
    %c0_8 = arith.constant 0 : index
    %9 = vector.load %arg2[%c8_7, %c0_8] : memref<32x128xf32, #tpu.memory_space<vmem>>, vector<8x128xf32>
    %cst_9 = arith.constant 1.000000e+00 : f32
    %10 = vector.broadcast %cst_9 : f32 to vector<8x128xf32>
    %11 = arith.mulf %9, %10 : vector<8x128xf32>
    %cst_10 = arith.constant 0.000000e+00 : f32
    %12 = vector.broadcast %cst_10 : f32 to vector<8x128xf32>
    %13 = arith.addf %11, %12 : vector<8x128xf32>
    %c16_11 = arith.constant 16 : index
    %c0_12 = arith.constant 0 : index
    %14 = vector.load %arg2[%c16_11, %c0_12] : memref<32x128xf32, #tpu.memory_space<vmem>>, vector<8x128xf32>
    %cst_13 = arith.constant 1.000000e+00 : f32
    %15 = vector.broadcast %cst_13 : f32 to vector<8x128xf32>
    %16 = arith.mulf %14, %15 : vector<8x128xf32>
    %cst_14 = arith.constant 0.000000e+00 : f32
    %17 = vector.broadcast %cst_14 : f32 to vector<8x128xf32>
    %18 = arith.addf %16, %17 : vector<8x128xf32>
    %cst_15 = arith.constant -4.13516665 : f32
    %cst_16 = arith.constant 4.13516665 : f32
    %19 = vector.broadcast %cst_15 : f32 to vector<8x128xf32>
    %20 = arith.maximumf %19, %18 : vector<8x128xf32>
    %21 = vector.broadcast %cst_16 : f32 to vector<8x128xf32>
    %22 = arith.minimumf %21, %20 : vector<8x128xf32>
    %c24_17 = arith.constant 24 : index
    %c0_18 = arith.constant 0 : index
    %23 = vector.load %arg2[%c24_17, %c0_18] : memref<32x128xf32, #tpu.memory_space<vmem>>, vector<8x128xf32>
    %cst_19 = arith.constant 1.000000e+00 : f32
    %24 = vector.broadcast %cst_19 : f32 to vector<8x128xf32>
    %25 = arith.mulf %23, %24 : vector<8x128xf32>
    %cst_20 = arith.constant 0.000000e+00 : f32
    %26 = vector.broadcast %cst_20 : f32 to vector<8x128xf32>
    %27 = arith.addf %25, %26 : vector<8x128xf32>
    %cst_21 = arith.constant -4.13516665 : f32
    %cst_22 = arith.constant 4.13516665 : f32
    %28 = vector.broadcast %cst_21 : f32 to vector<8x128xf32>
    %29 = arith.maximumf %28, %27 : vector<8x128xf32>
    %30 = vector.broadcast %cst_22 : f32 to vector<8x128xf32>
    %31 = arith.minimumf %30, %29 : vector<8x128xf32>
    %32 = arith.addf %0, %2 : vector<8x128xf32>
    %cst_23 = arith.constant 5.000000e-01 : f32
    %33 = vector.broadcast %cst_23 : f32 to vector<8x128xf32>
    %34 = arith.mulf %32, %33 : vector<8x128xf32>
    %35 = arith.addf %1, %3 : vector<8x128xf32>
    %cst_24 = arith.constant 5.000000e-01 : f32
    %36 = vector.broadcast %cst_24 : f32 to vector<8x128xf32>
    %37 = arith.mulf %35, %36 : vector<8x128xf32>
    %38 = arith.subf %2, %0 : vector<8x128xf32>
    %cst_25 = arith.constant 1.000000e+00 : f32
    %39 = vector.broadcast %cst_25 : f32 to vector<8x128xf32>
    %40 = arith.addf %38, %39 : vector<8x128xf32>
    %41 = arith.subf %3, %1 : vector<8x128xf32>
    %cst_26 = arith.constant 1.000000e+00 : f32
    %42 = vector.broadcast %cst_26 : f32 to vector<8x128xf32>
    %43 = arith.addf %41, %42 : vector<8x128xf32>
    %44 = math.exp %22 : vector<8x128xf32>
    %45 = arith.mulf %40, %44 : vector<8x128xf32>
    %46 = math.exp %31 : vector<8x128xf32>
    %47 = arith.mulf %43, %46 : vector<8x128xf32>
    %48 = arith.mulf %40, %8 : vector<8x128xf32>
    %49 = arith.addf %34, %48 : vector<8x128xf32>
    %50 = arith.mulf %43, %13 : vector<8x128xf32>
    %51 = arith.addf %37, %50 : vector<8x128xf32>
    %cst_27 = arith.constant 5.000000e-01 : f32
    %52 = vector.broadcast %cst_27 : f32 to vector<8x128xf32>
    %53 = arith.mulf %45, %52 : vector<8x128xf32>
    %54 = arith.subf %49, %53 : vector<8x128xf32>
    %cst_28 = arith.constant 5.000000e-01 : f32
    %55 = vector.broadcast %cst_28 : f32 to vector<8x128xf32>
    %56 = arith.addf %54, %55 : vector<8x128xf32>
    %cst_29 = arith.constant 0.000000e+00 : f32
    %cst_30 = arith.constant 6.300000e+01 : f32
    %57 = vector.broadcast %cst_29 : f32 to vector<8x128xf32>
    %58 = arith.maximumf %57, %56 : vector<8x128xf32>
    %59 = vector.broadcast %cst_30 : f32 to vector<8x128xf32>
    %60 = arith.minimumf %59, %58 : vector<8x128xf32>
    %c0_31 = arith.constant 0 : index
    %c0_32 = arith.constant 0 : index
    %61 = vector.load %arg3[%c0_31, %c0_32] : memref<32x128xf32, #tpu.memory_space<vmem>>, vector<8x128xf32>
    tpu.vector_store %arg3[%c0_31, %c0_32], %60 {strides = array<i32>} : memref<32x128xf32, #tpu.memory_space<vmem>>, vector<8x128xf32>,
    %cst_33 = arith.constant 5.000000e-01 : f32
    %62 = vector.broadcast %cst_33 : f32 to vector<8x128xf32>
    %63 = arith.mulf %47, %62 : vector<8x128xf32>
    %64 = arith.subf %51, %63 : vector<8x128xf32>
    %cst_34 = arith.constant 5.000000e-01 : f32
    %65 = vector.broadcast %cst_34 : f32 to vector<8x128xf32>
    %66 = arith.addf %64, %65 : vector<8x128xf32>
    %cst_35 = arith.constant 0.000000e+00 : f32
    %cst_36 = arith.constant 6.300000e+01 : f32
    %67 = vector.broadcast %cst_35 : f32 to vector<8x128xf32>
    %68 = arith.maximumf %67, %66 : vector<8x128xf32>
    %69 = vector.broadcast %cst_36 : f32 to vector<8x128xf32>
    %70 = arith.minimumf %69, %68 : vector<8x128xf32>
    %c8_37 = arith.constant 8 : index
    %c0_38 = arith.constant 0 : index
    %71 = vector.load %arg3[%c8_37, %c0_38] : memref<32x128xf32, #tpu.memory_space<vmem>>, vector<8x128xf32>
    tpu.vector_store %arg3[%c8_37, %c0_38], %70 {strides = array<i32>} : memref<32x128xf32, #tpu.memory_space<vmem>>, vector<8x128xf32>,
    %cst_39 = arith.constant 5.000000e-01 : f32
    %72 = vector.broadcast %cst_39 : f32 to vector<8x128xf32>
    %73 = arith.mulf %45, %72 : vector<8x128xf32>
    %74 = arith.addf %49, %73 : vector<8x128xf32>
    %cst_40 = arith.constant 5.000000e-01 : f32
    %75 = vector.broadcast %cst_40 : f32 to vector<8x128xf32>
    %76 = arith.subf %74, %75 : vector<8x128xf32>
    %cst_41 = arith.constant 0.000000e+00 : f32
    %cst_42 = arith.constant 6.300000e+01 : f32
    %77 = vector.broadcast %cst_41 : f32 to vector<8x128xf32>
    %78 = arith.maximumf %77, %76 : vector<8x128xf32>
    %79 = vector.broadcast %cst_42 : f32 to vector<8x128xf32>
    %80 = arith.minimumf %79, %78 : vector<8x128xf32>
    %c16_43 = arith.constant 16 : index
    %c0_44 = arith.constant 0 : index
    %81 = vector.load %arg3[%c16_43, %c0_44] : memref<32x128xf32, #tpu.memory_space<vmem>>, vector<8x128xf32>
    tpu.vector_store %arg3[%c16_43, %c0_44], %80 {strides = array<i32>} : memref<32x128xf32, #tpu.memory_space<vmem>>, vector<8x128xf32>,
    %cst_45 = arith.constant 5.000000e-01 : f32
    %82 = vector.broadcast %cst_45 : f32 to vector<8x128xf32>
    %83 = arith.mulf %47, %82 : vector<8x128xf32>
    %84 = arith.addf %51, %83 : vector<8x128xf32>
    %cst_46 = arith.constant 5.000000e-01 : f32
    %85 = vector.broadcast %cst_46 : f32 to vector<8x128xf32>
    %86 = arith.subf %84, %85 : vector<8x128xf32>
    %cst_47 = arith.constant 0.000000e+00 : f32
    %cst_48 = arith.constant 6.300000e+01 : f32
    %87 = vector.broadcast %cst_47 : f32 to vector<8x128xf32>
    %88 = arith.maximumf %87, %86 : vector<8x128xf32>
    %89 = vector.broadcast %cst_48 : f32 to vector<8x128xf32>
    %90 = arith.minimumf %89, %88 : vector<8x128xf32>
    %c24_49 = arith.constant 24 : index
    %c0_50 = arith.constant 0 : index
    %91 = vector.load %arg3[%c24_49, %c0_50] : memref<32x128xf32, #tpu.memory_space<vmem>>, vector<8x128xf32>
    tpu.vector_store %arg3[%c24_49, %c0_50], %90 {strides = array<i32>} : memref<32x128xf32, #tpu.memory_space<vmem>>, vector<8x128xf32>,
    return
  }
  func.func @transform_0(%arg0: i32) -> (i32, i32) {
    %c0_i32 = arith.constant 0 : i32
    %c0_i32_0 = arith.constant 0 : i32
    return %c0_i32, %arg0 : i32, i32
  }
  func.func @transform_1(%arg0: i32) -> (i32, i32) {
    %c0_i32 = arith.constant 0 : i32
    %c0_i32_0 = arith.constant 0 : i32
    return %c0_i32, %arg0 : i32, i32
  }
  func.func @transform_2(%arg0: i32) -> (i32, i32) {
    %c0_i32 = arith.constant 0 : i32
    %c0_i32_0 = arith.constant 0 : i32
    return %c0_i32, %arg0 : i32, i32
  }
}

</mosaic_0001>

<llo_original>
// kernel: _get_bboxes_single.1
$region0: #{_get_bboxes_single.1}
  #allocation0 [shape = 'u32[]', space=smem, size = 0x4, offset = 0x4, fixed_abs, tag = 'smem constant byte address 0x4 - core index']
  #allocation1 [shape = 'u32[144,128]{1,0:T(1,128)}', space=vmem, size = 0x12000, scoped, tag = 'internal scratch']
  %s0 = inlined_call_operand.vmem [shape: f32[32,128], index: 0, kind: input, shape index: {}]
  %s1 = inlined_call_operand.vmem [shape: f32[32,128], index: 1, kind: input, shape index: {}]
  %s2 = inlined_call_operand.vmem [shape: f32[32,128], index: 2, kind: output, shape index: {}]
  %s3 = sld [smem:[#allocation0]]
  $region18: #{_get_bboxes_single.1} parent=0
    _
  %s5 = ssub.s32 1, %s3
  %s6 = scalar_select 0, %s5, %s3
  // Predicated region
  $region2: #{_get_bboxes_single.1} parent=0 // pred_check
    _
  $region3: #{_get_bboxes_single.1} parent=0 // pred_check_branch
    %8 = sbr.rel (0) target = $region5
  $region4: #{_get_bboxes_single.1} parent=0 // pred_region
    _
  $region5: #{_get_bboxes_single.1} parent=0 // pred_fallthru
    _
  // Predicated region
  $region6: #{_get_bboxes_single.1} parent=0 // pred_check
    _
  $region7: #{_get_bboxes_single.1} parent=0 // pred_check_branch
    %10 = sbr.rel (0) target = $region9
  $region8: #{_get_bboxes_single.1} parent=0 // pred_region
    _
  $region9: #{_get_bboxes_single.1} parent=0 // pred_fallthru
    _
  %v11 = vld [vmem:[%s0] sm:$0xff]
  %v12 = vld [vmem:[%s0 + $0x8] sm:$0xff]
  %v13 = vld [vmem:[%s0 + $0x10] sm:$0xff]
  %v14 = vld [vmem:[%s0 + $0x18] sm:$0xff]
  %v15 = vld [vmem:[%s1] sm:$0xff]
  %v16 = vadd.f32 %v15, 0.0
  %v17 = vld [vmem:[%s1 + $0x8] sm:$0xff]
  %v18 = vadd.f32 %v17, 0.0
  %v19 = vld [vmem:[%s1 + $0x10] sm:$0xff]
  %v20 = vadd.f32 %v19, 0.0
  %v21 = vmax.f32 %v20, -4.1351666
  %v22 = vmin.f32 %v21, 4.1351666
  %v23 = vld [vmem:[%s1 + $0x18] sm:$0xff]
  %v24 = vadd.f32 %v23, 0.0
  %v25 = vmax.f32 %v24, -4.1351666
  %v26 = vmin.f32 %v25, 4.1351666
  %v27 = vadd.f32 %v11, %v13
  %v28 = vmul.f32 %v27, 0.5
  %v29 = vadd.f32 %v12, %v14
  %v30 = vmul.f32 %v29, 0.5
  %v31 = vsub.f32 %v13, %v11
  %v32 = vadd.f32 %v31, 1.0
  %v33 = vsub.f32 %v14, %v12
  %v34 = vadd.f32 %v33, 1.0
  %v35 = vmul.f32 %v22, 1.442695
  %v36 = vpow.pop %v35
  %v37 = vmul.f32 %v32, %v36
  %v38 = vmul.f32 %v26, 1.442695
  %v39 = vpow.pop %v38
  %v40 = vmul.f32 %v34, %v39
  %v41 = vmul.f32 %v32, %v16
  %v42 = vadd.f32 %v28, %v41
  %v43 = vmul.f32 %v34, %v18
  %v44 = vadd.f32 %v30, %v43
  %v45 = vmul.f32 %v37, 0.5
  %v46 = vsub.f32 %v42, %v45
  %v47 = vadd.f32 %v46, 0.5
  %v48 = vmax.f32 %v47, 0.0
  %v49 = vmin.f32 %v48, 63.0
  %50 = vst [vmem:[%s2] sm:$0xff] %v49
  %v51 = vmul.f32 %v40, 0.5
  %v52 = vsub.f32 %v44, %v51
  %v53 = vadd.f32 %v52, 0.5
  %v54 = vmax.f32 %v53, 0.0
  %v55 = vmin.f32 %v54, 63.0
  %56 = vst [vmem:[%s2 + $0x8] sm:$0xff] %v55
  %v57 = vadd.f32 %v42, %v45
  %v58 = vsub.f32 %v57, 0.5
  %v59 = vmax.f32 %v58, 0.0
  %v60 = vmin.f32 %v59, 63.0
  %61 = vst [vmem:[%s2 + $0x10] sm:$0xff] %v60
  %v62 = vadd.f32 %v44, %v51
  %v63 = vsub.f32 %v62, 0.5
  %v64 = vmax.f32 %v63, 0.0
  %v65 = vmin.f32 %v64, 63.0
  %66 = vst [vmem:[%s2 + $0x18] sm:$0xff] %v65
  // Predicated region
  $region10: #{_get_bboxes_single.1} parent=0 // pred_check
    _
  $region11: #{_get_bboxes_single.1} parent=0 // pred_check_branch
    %68 = sbr.rel (0) target = $region13
  $region12: #{_get_bboxes_single.1} parent=0 // pred_region
    _
  $region13: #{_get_bboxes_single.1} parent=0 // pred_fallthru
    _
  // Predicated region
  $region14: #{_get_bboxes_single.1} parent=0 // pred_check
    _
  $region15: #{_get_bboxes_single.1} parent=0 // pred_check_branch
    %70 = sbr.rel (0) target = $region17
  $region16: #{_get_bboxes_single.1} parent=0 // pred_region
    _
  $region17: #{_get_bboxes_single.1} parent=0 // pred_fallthru
    _

</llo_original>
